<compile_context>
chip_gen: v5e
topology: v5e:2x2
jax: 0.10.0
libtpu: 0.0.40
codegen_flags: <defaults>
</compile_context>

<pallas_src>
import jax
import jax.numpy as jnp
from jax.experimental import pallas as pl
from jax.experimental.pallas import tpu as pltpu


def complex_nn_kernel(x_ref, w1_ref, b1_ref, w2_ref, b2_ref, w3_ref, b3_ref,
                      o_ref):
    """fc1 -> relu -> fc2 -> relu -> fc3 -> relu -> log_softmax(dim=-1).

    Matmuls run on the MXU in the weight dtype (f32 or bf16, matching x which
    is pre-cast in the wrapper) with f32 accumulation; bias add, ReLU and
    log_softmax stay in f32.
    """
    wdt = w1_ref.dtype
    x = x_ref[...]  # already in the weight dtype (cast in the wrapper)

    # fc1 + ReLU
    h = jnp.dot(x, w1_ref[...], preferred_element_type=jnp.float32)
    h = jnp.maximum(h + b1_ref[...], 0.0)

    # fc2 + ReLU
    # TODO(synk): K-tile fc2 (emit_pipeline over row-blocks of w2 with an f32
    # scratch accumulator) when H*H*itemsize exceeds ~half the per-generation
    # VMEM cap; the current path keeps w2 fully resident (single-buffered).
    h = jnp.dot(h.astype(wdt), w2_ref[...], preferred_element_type=jnp.float32)
    h = jnp.maximum(h + b2_ref[...], 0.0)

    # fc3 + ReLU.  N=2 output columns: MXU underutilization here is one cheap
    # pass over h; deliberately NOT zero-padded to 128 lanes (padding would
    # leak exp(relu(0)) = 1 into the log_softmax denominator unless masked).
    h = jnp.dot(h.astype(wdt), w3_ref[...], preferred_element_type=jnp.float32)
    h = jnp.maximum(h + b3_ref[...], 0.0)

    # LogSoftmax over the last dim (torch.nn.LogSoftmax() on 2-D -> dim=1),
    # max-subtracted, all in f32.
    C = h.shape[-1]
    if C == 2:
        # Explicit 2-column math: pure VPU/EUP, avoids XLU cross-lane reduces
        # over a vreg that is only 2/128 lanes occupied.
        l0 = h[:, 0:1]
        l1 = h[:, 1:2]
        m = jnp.maximum(l0, l1)
        lse = m + jnp.log(jnp.exp(l0 - m) + jnp.exp(l1 - m))
    else:
        m = jnp.max(h, axis=-1, keepdims=True)
        lse = m + jnp.log(jnp.sum(jnp.exp(h - m), axis=-1, keepdims=True))
    o_ref[...] = (h - lse).astype(o_ref.dtype)


def _pick_bm(B, sublane, max_bm=512):
    """Largest batch tile up to `max_bm` rows, balanced across grid steps and
    rounded up to the LHS sublane packing (8 for f32, 16 for bf16).  No longer
    shrinks bm just to create >=2 grid steps (that only helps v7x megacore and
    hurts single-TC v5e/v6e via per-step overhead + smaller MXU M)."""
    nsteps = pl.cdiv(B, max_bm)
    return pl.cdiv(pl.cdiv(B, nsteps), sublane) * sublane


def _phys_vmem_bytes():
    try:
        info = pltpu.get_tpu_info()
        return int(getattr(info, "vmem_capacity_bytes", 64 * 1024 * 1024))
    except Exception:  # pragma: no cover - defensive, keep kernel runnable
        return 64 * 1024 * 1024


def complex_nn_forward(x, params, *, bm=None):
    """x: [B, D] float32 (cast to the weight dtype before the kernel).
    params: pre-transposed weights [in, out] (f32 or bf16), f32 biases [1, out].
    """
    B, D = x.shape
    H = params["w1"].shape[1]
    C = params["w3"].shape[1]
    wdt = params["w1"].dtype
    w_item = wdt.itemsize
    sublane = 16 if w_item == 2 else 8

    if bm is None:
        bm = _pick_bm(B, sublane)
    nsteps = pl.cdiv(B, bm)
    assert bm % 8 == 0 or nsteps == 1, (
        "bm must be a multiple of 8 (f32 sublane tiling) unless it covers the "
        "whole (padded) batch in one tile")

    # Cast x to the weight dtype in the wrapper: halves the streamed x HBM
    # traffic / VMEM tile on the bf16 path and removes a per-step in-kernel
    # convert.  (No-op for f32.)
    x = x.astype(wdt)
    x_item = x.dtype.itemsize

    # Pad the batch so grid * bm covers it exactly (a partial last tile would
    # otherwise be silently dropped); padded rows are sliced off afterwards.
    Bp = nsteps * bm
    if Bp != B:
        x = jnp.pad(x, ((0, Bp - B), (0, 0)))

    # Weights/biases have constant index_maps (same block every grid step), so
    # single-buffer them to halve their VMEM footprint.  Only the streaming
    # x / output tiles stay double-buffered.
    const = dict(pipeline_mode=pl.Buffered(1))
    in_specs = [
        pl.BlockSpec((bm, D), lambda i: (i, 0)),            # x tile (streamed)
        pl.BlockSpec((D, H), lambda i: (0, 0), **const),    # w1
        pl.BlockSpec((1, H), lambda i: (0, 0), **const),    # b1
        pl.BlockSpec((H, H), lambda i: (0, 0), **const),    # w2
        pl.BlockSpec((1, H), lambda i: (0, 0), **const),    # b2
        pl.BlockSpec((H, C), lambda i: (0, 0), **const),    # w3
        pl.BlockSpec((1, C), lambda i: (0, 0), **const),    # b3
    ]
    out_specs = pl.BlockSpec((bm, C), lambda i: (i, 0))

    # Generation-aware VMEM budget: estimated footprint (resident single-
    # buffered weights + double-buffered x/out tiles + live f32 intermediates
    # + bf16 cast temporaries) with 2x headroom, capped at ~75% of physical
    # VMEM (~96 MiB on v5e/v6e, ~48 MiB on v7x) and never above 100 MiB.
    weight_bytes = (D * H + H * H + H * C) * w_item
    est = (weight_bytes                                # weights, 1 buffer each
           + (2 * H + C) * 4                           # f32 biases
           + 2 * bm * D * x_item                       # x tile, double-buffered
           + 2 * bm * C * 4                            # out tile, double-buffered
           + 3 * bm * H * 4                            # live f32 intermediates
           + (2 * bm * H * w_item if w_item < 4 else 0))  # bf16 cast temps
    cap = min(100 * 1024 * 1024, (3 * _phys_vmem_bytes()) // 4)
    vmem_limit = min(cap, max(32 * 1024 * 1024, 2 * est + 2 * 1024 * 1024))

    # Megacore (v7x): marking the batch axis "parallel" makes each TensorCore
    # fetch the full constant-indexed weight set, doubling weight HBM reads.
    # Only request it when total MXU work clearly dominates that duplicated
    # fetch (total_flops / weight_bytes = 2*B/itemsize >= ~512 flops/byte).
    total_flops = 2 * Bp * (D * H + H * H + H * C)
    use_megacore = nsteps >= 2 and total_flops >= 512 * weight_bytes
    batch_sem = "parallel" if use_megacore else "arbitrary"

    cost = pl.CostEstimate(
        flops=total_flops,
        transcendentals=Bp * (C + 1),                  # exp per logit + log/row
        bytes_accessed=(Bp * D * x_item + weight_bytes
                        + (2 * H + C) * 4 + Bp * C * 4),
    )

    out = pl.pallas_call(
        complex_nn_kernel,
        out_shape=jax.ShapeDtypeStruct((Bp, C), jnp.float32),
        grid_spec=pltpu.PrefetchScalarGridSpec(
            num_scalar_prefetch=0,
            grid=(nsteps,),
            in_specs=in_specs,
            out_specs=out_specs,
        ),
        compiler_params=pltpu.CompilerParams(
            dimension_semantics=(batch_sem,),
            vmem_limit_bytes=vmem_limit,
        ),
        cost_estimate=cost,
    )(x, params["w1"], params["b1"], params["w2"], params["b2"],
      params["w3"], params["b3"])
    return out[:B] if Bp != B else out


def init_params(key, dims_in, hidden, n_out=2, param_dtype=jnp.float32):
    """Deterministic init mimicking torch.nn.Linear (uniform +-1/sqrt(fan_in)).

    Weights stored pre-transposed as [in, out] in `param_dtype` (bf16 is the
    production path: halves weight HBM/VMEM traffic and hits the bf16 MXU peak
    on v6e/v7x; f32 accumulation keeps accuracy bounded).  Biases stay f32.
    """
    ks = jax.random.split(key, 6)

    def linear(kw, kb, fan_in, fan_out):
        bound = 1.0 / jnp.sqrt(fan_in)
        w = jax.random.uniform(kw, (fan_in, fan_out), jnp.float32,
                               -bound, bound).astype(param_dtype)
        b = jax.random.uniform(kb, (1, fan_out), jnp.float32, -bound, bound)
        return w, b

    w1, b1 = linear(ks[0], ks[1], dims_in, hidden)
    w2, b2 = linear(ks[2], ks[3], hidden, hidden)
    w3, b3 = linear(ks[4], ks[5], hidden, n_out)
    return {"w1": w1, "b1": b1, "w2": w2, "b2": b2, "w3": w3, "b3": b3}


def reference_forward(x, p):
    w1 = p["w1"].astype(jnp.float32)
    w2 = p["w2"].astype(jnp.float32)
    w3 = p["w3"].astype(jnp.float32)
    h = jnp.maximum(x @ w1 + p["b1"], 0.0)
    h = jnp.maximum(h @ w2 + p["b2"], 0.0)
    h = jnp.maximum(h @ w3 + p["b3"], 0.0)
    return jax.nn.log_softmax(h, axis=-1)


if __name__ == "__main__":
    B, D, H = 16, 16, 32
    key = jax.random.PRNGKey(0)
    kx, kp = jax.random.split(key)

    x = jax.random.normal(kx, (B, D), jnp.float32)

    # f32 path (tight check): single 16-row tile, one grid step.
    params = init_params(kp, D, H)
    out = jax.block_until_ready(complex_nn_forward(x, params))
    ref = reference_forward(x, params)
    assert out.shape == (B, 2)
    assert jnp.allclose(out, ref, atol=1e-5, rtol=1e-5)

    # Ragged batch (B not a multiple of bm): exercises the pad + slice path
    # and a 2-step grid.
    xr = x[:13]
    out_r = jax.block_until_ready(complex_nn_forward(xr, params, bm=8))
    assert out_r.shape == (13, 2)
    assert jnp.allclose(out_r, ref[:13], atol=1e-5, rtol=1e-5)

    # bf16 weights + bf16 x (cast in wrapper) with f32 accumulation; loose
    # tolerance against the f32-activation reference.
    params_bf16 = init_params(kp, D, H, param_dtype=jnp.bfloat16)
    out_bf16 = jax.block_until_ready(complex_nn_forward(x, params_bf16))
    ref_bf16 = reference_forward(x, params_bf16)
    assert out_bf16.shape == (B, 2)
    assert bool(jnp.all(jnp.isfinite(out_bf16)))
    assert jnp.allclose(out_bf16, ref_bf16, atol=2e-1, rtol=1e-1)

    print("KERNEL_OK")
</pallas_src>

<mosaic_0001>
module attributes {stable_mosaic.version = 11 : i64} {
  func.func @complex_nn_kernel(%arg0: i32, %arg1: memref<16x16xf32, #tpu.memory_space<vmem>>, %arg2: memref<16x32xf32, #tpu.memory_space<vmem>>, %arg3: memref<1x32xf32, #tpu.memory_space<vmem>>, %arg4: memref<32x32xf32, #tpu.memory_space<vmem>>, %arg5: memref<1x32xf32, #tpu.memory_space<vmem>>, %arg6: memref<32x2xf32, #tpu.memory_space<vmem>>, %arg7: memref<1x2xf32, #tpu.memory_space<vmem>>, %arg8: memref<16x2xf32, #tpu.memory_space<vmem>>) attributes {dimension_semantics = [#tpu.dimension_semantics<arbitrary>], iteration_bounds = array<i64: 1>, scalar_prefetch = 0 : i64, scratch_operands = 0 : i64, tpu.core_type = #tpu.core_type<tc>, window_params = [{transform_indices = @transform_0, window_bounds = array<i64: 16, 16>}, {pipeline_mode = #tpu.pipeline_mode<synchronous>, transform_indices = @transform_1, window_bounds = array<i64: 16, 32>}, {pipeline_mode = #tpu.pipeline_mode<synchronous>, transform_indices = @transform_2, window_bounds = array<i64: 1, 32>}, {pipeline_mode = #tpu.pipeline_mode<synchronous>, transform_indices = @transform_3, window_bounds = array<i64: 32, 32>}, {pipeline_mode = #tpu.pipeline_mode<synchronous>, transform_indices = @transform_4, window_bounds = array<i64: 1, 32>}, {pipeline_mode = #tpu.pipeline_mode<synchronous>, transform_indices = @transform_5, window_bounds = array<i64: 32, 2>}, {pipeline_mode = #tpu.pipeline_mode<synchronous>, transform_indices = @transform_6, window_bounds = array<i64: 1, 2>}, {transform_indices = @transform_7, window_bounds = array<i64: 16, 2>}]} {
    %c0 = arith.constant 0 : index
    %c0_0 = arith.constant 0 : index
    %0 = vector.load %arg1[%c0, %c0_0] : memref<16x16xf32, #tpu.memory_space<vmem>>, vector<16x16xf32>
    %c0_1 = arith.constant 0 : index
    %c0_2 = arith.constant 0 : index
    %1 = vector.load %arg2[%c0_1, %c0_2] : memref<16x32xf32, #tpu.memory_space<vmem>>, vector<16x32xf32>
    %cst = arith.constant dense<0.000000e+00> : vector<16x32xf32>
    %2 = tpu.matmul %0, %1, %cst {dimension_numbers = #tpu.dot_dimension_numbers<[1], [0], [0], [1], [0, 0, 1, 1], [], []>} : vector<16x16xf32>, vector<16x32xf32>, vector<16x32xf32> -> vector<16x32xf32>
    %c0_3 = arith.constant 0 : index
    %c0_4 = arith.constant 0 : index
    %3 = vector.load %arg3[%c0_3, %c0_4] : memref<1x32xf32, #tpu.memory_space<vmem>>, vector<1x32xf32>
    %4 = vector.broadcast %3 : vector<1x32xf32> to vector<16x32xf32>
    %5 = arith.addf %2, %4 : vector<16x32xf32>
    %cst_5 = arith.constant 0.000000e+00 : f32
    %6 = vector.broadcast %cst_5 : f32 to vector<16x32xf32>
    %7 = arith.maximumf %5, %6 : vector<16x32xf32>
    %c0_6 = arith.constant 0 : index
    %c0_7 = arith.constant 0 : index
    %8 = vector.load %arg4[%c0_6, %c0_7] : memref<32x32xf32, #tpu.memory_space<vmem>>, vector<32x32xf32>
    %cst_8 = arith.constant dense<0.000000e+00> : vector<16x32xf32>
    %9 = tpu.matmul %7, %8, %cst_8 {dimension_numbers = #tpu.dot_dimension_numbers<[1], [0], [0], [1], [0, 0, 1, 1], [], []>} : vector<16x32xf32>, vector<32x32xf32>, vector<16x32xf32> -> vector<16x32xf32>
    %c0_9 = arith.constant 0 : index
    %c0_10 = arith.constant 0 : index
    %10 = vector.load %arg5[%c0_9, %c0_10] : memref<1x32xf32, #tpu.memory_space<vmem>>, vector<1x32xf32>
    %11 = vector.broadcast %10 : vector<1x32xf32> to vector<16x32xf32>
    %12 = arith.addf %9, %11 : vector<16x32xf32>
    %cst_11 = arith.constant 0.000000e+00 : f32
    %13 = vector.broadcast %cst_11 : f32 to vector<16x32xf32>
    %14 = arith.maximumf %12, %13 : vector<16x32xf32>
    %c0_12 = arith.constant 0 : index
    %c0_13 = arith.constant 0 : index
    %15 = vector.load %arg6[%c0_12, %c0_13] : memref<32x2xf32, #tpu.memory_space<vmem>>, vector<32x2xf32>
    %cst_14 = arith.constant dense<0.000000e+00> : vector<16x2xf32>
    %16 = tpu.matmul %14, %15, %cst_14 {dimension_numbers = #tpu.dot_dimension_numbers<[1], [0], [0], [1], [0, 0, 1, 1], [], []>} : vector<16x32xf32>, vector<32x2xf32>, vector<16x2xf32> -> vector<16x2xf32>
    %c0_15 = arith.constant 0 : index
    %c0_16 = arith.constant 0 : index
    %17 = vector.load %arg7[%c0_15, %c0_16] : memref<1x2xf32, #tpu.memory_space<vmem>>, vector<1x2xf32>
    %18 = vector.broadcast %17 : vector<1x2xf32> to vector<16x2xf32>
    %19 = arith.addf %16, %18 : vector<16x2xf32>
    %cst_17 = arith.constant 0.000000e+00 : f32
    %20 = vector.broadcast %cst_17 : f32 to vector<16x2xf32>
    %21 = arith.maximumf %19, %20 : vector<16x2xf32>
    %22 = vector.extract_strided_slice %21 {offsets = [0, 0], sizes = [16, 1], strides = [1, 1]} : vector<16x2xf32> to vector<16x1xf32>
    %23 = vector.extract_strided_slice %21 {offsets = [0, 1], sizes = [16, 1], strides = [1, 1]} : vector<16x2xf32> to vector<16x1xf32>
    %24 = arith.maximumf %22, %23 : vector<16x1xf32>
    %25 = arith.subf %22, %24 : vector<16x1xf32>
    %26 = math.exp %25 : vector<16x1xf32>
    %27 = arith.subf %23, %24 : vector<16x1xf32>
    %28 = math.exp %27 : vector<16x1xf32>
    %29 = arith.addf %26, %28 : vector<16x1xf32>
    %30 = math.log %29 : vector<16x1xf32>
    %31 = arith.addf %24, %30 : vector<16x1xf32>
    %32 = vector.broadcast %31 : vector<16x1xf32> to vector<16x2xf32>
    %33 = arith.subf %21, %32 : vector<16x2xf32>
    %c0_18 = arith.constant 0 : index
    %c0_19 = arith.constant 0 : index
    %34 = vector.load %arg8[%c0_18, %c0_19] : memref<16x2xf32, #tpu.memory_space<vmem>>, vector<16x2xf32>
    tpu.vector_store %arg8[%c0_18, %c0_19], %33 {strides = array<i32>} : memref<16x2xf32, #tpu.memory_space<vmem>>, vector<16x2xf32>,
    return
  }
  func.func @transform_0(%arg0: i32) -> (i32, i32) {
    %c0_i32 = arith.constant 0 : i32
    %c0_i32_0 = arith.constant 0 : i32
    return %arg0, %c0_i32 : i32, i32
  }
  func.func @transform_1(%arg0: i32) -> (i32, i32) {
    %c0_i32 = arith.constant 0 : i32
    %c0_i32_0 = arith.constant 0 : i32
    %c0_i32_1 = arith.constant 0 : i32
    return %c0_i32, %c0_i32_0 : i32, i32
  }
  func.func @transform_2(%arg0: i32) -> (i32, i32) {
    %c0_i32 = arith.constant 0 : i32
    %c0_i32_0 = arith.constant 0 : i32
    %c0_i32_1 = arith.constant 0 : i32
    return %c0_i32, %c0_i32_0 : i32, i32
  }
  func.func @transform_3(%arg0: i32) -> (i32, i32) {
    %c0_i32 = arith.constant 0 : i32
    %c0_i32_0 = arith.constant 0 : i32
    %c0_i32_1 = arith.constant 0 : i32
    return %c0_i32, %c0_i32_0 : i32, i32
  }
  func.func @transform_4(%arg0: i32) -> (i32, i32) {
    %c0_i32 = arith.constant 0 : i32
    %c0_i32_0 = arith.constant 0 : i32
    %c0_i32_1 = arith.constant 0 : i32
    return %c0_i32, %c0_i32_0 : i32, i32
  }
  func.func @transform_5(%arg0: i32) -> (i32, i32) {
    %c0_i32 = arith.constant 0 : i32
    %c0_i32_0 = arith.constant 0 : i32
    %c0_i32_1 = arith.constant 0 : i32
    return %c0_i32, %c0_i32_0 : i32, i32
  }
  func.func @transform_6(%arg0: i32) -> (i32, i32) {
    %c0_i32 = arith.constant 0 : i32
    %c0_i32_0 = arith.constant 0 : i32
    %c0_i32_1 = arith.constant 0 : i32
    return %c0_i32, %c0_i32_0 : i32, i32
  }
  func.func @transform_7(%arg0: i32) -> (i32, i32) {
    %c0_i32 = arith.constant 0 : i32
    %c0_i32_0 = arith.constant 0 : i32
    return %arg0, %c0_i32 : i32, i32
  }
}

</mosaic_0001>

<llo_original>
// kernel: tpu_custom_call.1
$region0: #{tpu_custom_call.1}
  #allocation0 [shape = 'u32[]', space=smem, size = 0x4, offset = 0x4, fixed_abs, tag = 'smem constant byte address 0x4 - core index']
  #allocation1 [shape = 'u32[72,128]{1,0:T(1,128)}', space=vmem, size = 0x9000, scoped, tag = 'internal scratch']
  %s0 = inlined_call_operand.hbm [shape: f32[16,16], index: 0, kind: input, shape index: {}]
  %s1 = inlined_call_operand.hbm [shape: f32[16,32], index: 1, kind: input, shape index: {}]
  %s2 = inlined_call_operand.vmem [shape: f32[1,32], index: 2, kind: input, shape index: {}]
  %s3 = inlined_call_operand.vmem [shape: f32[32,32], index: 3, kind: input, shape index: {}]
  %s4 = inlined_call_operand.vmem [shape: f32[1,32], index: 4, kind: input, shape index: {}]
  %s5 = inlined_call_operand.vmem [shape: f32[32,2], index: 5, kind: input, shape index: {}]
  %s6 = inlined_call_operand.vmem [shape: f32[1,2], index: 6, kind: input, shape index: {}]
  %s7 = inlined_call_operand.vmem [shape: f32[16,2], index: 7, kind: output, shape index: {}]
  %s8 = sld [smem:[#allocation0]]
  $region46: #{tpu_custom_call.1} parent=0
    _
  %s10 = ssub.s32 1, %s8
  %s11 = scalar_select 0, %s10, %s8
  $region1: #{tpu_custom_call.1} parent=0
    #allocation2 [shape = 'u8[8192]{0}', space=vmem, size = 0x2000, scoped, tag = 'input window, operand 0, single buffered']
    #allocation3 [shape = 's32[1]{0}', space=sflag, size = 0x4, scoped, tag = 'scoped memory for tpu_custom_call.1']
    #allocation4 [shape = 'u8[8192]{0}', space=vmem, size = 0x2000, scoped, tag = 'input window, operand 1, single buffered']
    #allocation5 [shape = 's32[1]{0}', space=sflag, size = 0x4, scoped, tag = 'scoped memory for tpu_custom_call.1']
    %12 = vsyncpa [#allocation3], 0
    %13 = vsyncpa [#allocation5], 0
    // Predicated region
    $region2: #{tpu_custom_call.1} parent=1 // pred_check
      _
    $region3: #{tpu_custom_call.1} parent=1 // pred_check_branch
      %15 = sbr.rel (0) target = $region5
    $region4: #{tpu_custom_call.1} parent=1 // pred_region
      %17 = vsyncadd [#allocation3], 0
      %s18 = sshll.u32 %s0, 4
      %s19 = int_to_ptr.hbm [resolvable:$true] %s18
      %s20 = sshll.u32 [#allocation2], 4
      %s21 = int_to_ptr.vmem [resolvable:$true] %s20
      %26 = dma.hbm_to_vmem [thread:$0]  %s19, 256, %s21, [#allocation3], 128, 128, 8
    $region5: #{tpu_custom_call.1} parent=1 // pred_fallthru
      _
    // Predicated region
    $region6: #{tpu_custom_call.1} parent=1 // pred_check
      _
    $region7: #{tpu_custom_call.1} parent=1 // pred_check_branch
      %28 = sbr.rel (0) target = $region9
    $region8: #{tpu_custom_call.1} parent=1 // pred_region
      %30 = vsyncadd [#allocation5], 0
      %s31 = sshll.u32 %s1, 4
      %s32 = int_to_ptr.hbm [resolvable:$true] %s31
      %s33 = sshll.u32 [#allocation4], 4
      %s34 = int_to_ptr.vmem [resolvable:$true] %s33
      %39 = dma.hbm_to_vmem [thread:$0]  %s32, 256, %s34, [#allocation5], 128, 128, 8
    $region9: #{tpu_custom_call.1} parent=1 // pred_fallthru
      _
    // Predicated region
    $region10: #{tpu_custom_call.1} parent=1 // pred_check
      _
    $region11: #{tpu_custom_call.1} parent=1 // pred_check_branch
      %41 = sbr.rel (0) target = $region13
    $region12: #{tpu_custom_call.1} parent=1 // pred_region
      _
    $region13: #{tpu_custom_call.1} parent=1 // pred_fallthru
      _
    // Predicated region
    $region14: #{tpu_custom_call.1} parent=1 // pred_check
      _
    $region15: #{tpu_custom_call.1} parent=1 // pred_check_branch
      %43 = sbr.rel (0) target = $region17
    $region16: #{tpu_custom_call.1} parent=1 // pred_region
      _
    $region17: #{tpu_custom_call.1} parent=1 // pred_fallthru
      _
    // Predicated region
    $region18: #{tpu_custom_call.1} parent=1 // pred_check
      _
    $region19: #{tpu_custom_call.1} parent=1 // pred_check_branch
      %45 = sbr.rel (0) target = $region21
    $region20: #{tpu_custom_call.1} parent=1 // pred_region
      _
    $region21: #{tpu_custom_call.1} parent=1 // pred_fallthru
      _
    // Predicated region
    $region22: #{tpu_custom_call.1} parent=1 // pred_check
      _
    $region23: #{tpu_custom_call.1} parent=1 // pred_check_branch
      %47 = sbr.rel (0) target = $region25
    $region24: #{tpu_custom_call.1} parent=1 // pred_region
      _
    $region25: #{tpu_custom_call.1} parent=1 // pred_fallthru
      _
    // Predicated region
    $region26: #{tpu_custom_call.1} parent=1 // pred_check
      _
    $region27: #{tpu_custom_call.1} parent=1 // pred_check_branch
      %49 = sbr.rel (0) target = $region29
    $region28: #{tpu_custom_call.1} parent=1 // pred_region
      _
    $region29: #{tpu_custom_call.1} parent=1 // pred_fallthru
      _
    // Predicated region
    $region30: #{tpu_custom_call.1} parent=1 // pred_check
      _
    $region31: #{tpu_custom_call.1} parent=1 // pred_check_branch
      %51 = sbr.rel (0) target = $region33
    $region32: #{tpu_custom_call.1} parent=1 // pred_region
      %53 = dma.done [#allocation3], 256
    $region33: #{tpu_custom_call.1} parent=1 // pred_fallthru
      _
    // Predicated region
    $region34: #{tpu_custom_call.1} parent=1 // pred_check
      _
    $region35: #{tpu_custom_call.1} parent=1 // pred_check_branch
      %55 = sbr.rel (0) target = $region37
    $region36: #{tpu_custom_call.1} parent=1 // pred_region
      %57 = dma.done [#allocation5], 256
    $region37: #{tpu_custom_call.1} parent=1 // pred_fallthru
      _
    %v58 = vld [vmem:[#allocation2] sm:$0xff]
    %v59 = vld [vmem:[#allocation2 + $0x8] sm:$0xff]
    %v60 = vld [vmem:[#allocation4] sm:$0xff]
    %v61 = vld [vmem:[#allocation4 + $0x8] sm:$0xff]
    %v62 = vld [vmem:[%s2] sm:$0x1]
    %v64 = vperm.slane %v62, 0
    %vm66 = vcmask 130048
    %v68 = vsel %vm66, %v58, 0
    %v71 = vsel %vm66, %v59, 0
    %73 = vmatpush.msra.mxu0 0.0
    %74 = vmatpush.msra.mxu0 0.0
    %75 = vmatpush.msra.mxu0 0.0
    %76 = vmatpush.msra.mxu0 0.0
    %77 = vmatpush.msra.mxu0 0.0
    %78 = vmatpush.msra.mxu0 0.0
    %79 = vmatpush.msra.mxu0 0.0
    %80 = vmatpush.msra.mxu0 0.0
    %81 = vmatpush.msra.mxu0 0.0
    %82 = vmatpush.msra.mxu0 0.0
    %83 = vmatpush.msra.mxu0 0.0
    %84 = vmatpush.msra.mxu0 0.0
    %85 = vmatpush.msra.mxu0 0.0
    %86 = vmatpush.msra.mxu0 0.0
    %87 = vmatpush.msra.mxu0 %v61
    %88 = vmatpush.msra.mxu0 %v60
    %89 = vmatmul.f32.gmra.mxu0 %v68
    %v90 = vpop.f32.mrf.mxu0
    %v91 = vadd.f32 %v64, %v90
    %92 = vmatmul.f32.gmra.mxu0 %v71
    %v93 = vpop.f32.mrf.mxu0
    %v94 = vadd.f32 %v64, %v93
    %95 = vdwg.mxu0
    %v96 = vmax.f32 %v91, 0.0
    %v97 = vmax.f32 %v94, 0.0
    %v98 = vld [vmem:[%s3] sm:$0xff]
    %v99 = vld [vmem:[%s3 + $0x8] sm:$0xff]
    %v100 = vld [vmem:[%s3 + $0x10] sm:$0xff]
    %v101 = vld [vmem:[%s3 + $0x18] sm:$0xff]
    %v102 = vld [vmem:[%s4] sm:$0x1]
    %v104 = vperm.slane %v102, 0
    %vm106 = vcmask 261120
    %v108 = vsel %vm106, %v96, 0
    %v111 = vsel %vm106, %v97, 0
    %113 = vmatpush.msra.mxu0 0.0
    %114 = vmatpush.msra.mxu0 0.0
    %115 = vmatpush.msra.mxu0 0.0
    %116 = vmatpush.msra.mxu0 0.0
    %117 = vmatpush.msra.mxu0 0.0
    %118 = vmatpush.msra.mxu0 0.0
    %119 = vmatpush.msra.mxu0 0.0
    %120 = vmatpush.msra.mxu0 0.0
    %121 = vmatpush.msra.mxu0 0.0
    %122 = vmatpush.msra.mxu0 0.0
    %123 = vmatpush.msra.mxu0 0.0
    %124 = vmatpush.msra.mxu0 0.0
    %125 = vmatpush.msra.mxu0 %v101
    %126 = vmatpush.msra.mxu0 %v100
    %127 = vmatpush.msra.mxu0 %v99
    %128 = vmatpush.msra.mxu0 %v98
    %129 = vmatmul.f32.gmra.mxu0 %v108
    %v130 = vpop.f32.mrf.mxu0
    %v131 = vadd.f32 %v104, %v130
    %132 = vmatmul.f32.gmra.mxu0 %v111
    %v133 = vpop.f32.mrf.mxu0
    %v134 = vadd.f32 %v104, %v133
    %135 = vdwg.mxu0
    %v136 = vmax.f32 %v131, 0.0
    %v137 = vmax.f32 %v134, 0.0
    %v138 = vld [vmem:[%s5] sm:$0xff]
    %v139 = vld [vmem:[%s5 + $0x8] sm:$0xff]
    %v140 = vld [vmem:[%s5 + $0x10] sm:$0xff]
    %v141 = vld [vmem:[%s5 + $0x18] sm:$0xff]
    %v142 = vld [vmem:[%s6] sm:$0x1]
    %v144 = vperm.slane %v142, 0
    %v147 = vsel %vm106, %v136, 0
    %v150 = vsel %vm106, %v137, 0
    %152 = vmatpush.msra.mxu0 0.0
    %153 = vmatpush.msra.mxu0 0.0
    %154 = vmatpush.msra.mxu0 0.0
    %155 = vmatpush.msra.mxu0 0.0
    %156 = vmatpush.msra.mxu0 0.0
    %157 = vmatpush.msra.mxu0 0.0
    %158 = vmatpush.msra.mxu0 0.0
    %159 = vmatpush.msra.mxu0 0.0
    %160 = vmatpush.msra.mxu0 0.0
    %161 = vmatpush.msra.mxu0 0.0
    %162 = vmatpush.msra.mxu0 0.0
    %163 = vmatpush.msra.mxu0 0.0
    %164 = vmatpush.msra.mxu0 %v141
    %165 = vmatpush.msra.mxu0 %v140
    %166 = vmatpush.msra.mxu0 %v139
    %167 = vmatpush.msra.mxu0 %v138
    %168 = vmatmul.f32.gmra.mxu0 %v147
    %v169 = vpop.f32.mrf.mxu0
    %v170 = vadd.f32 %v144, %v169
    %171 = vmatmul.f32.gmra.mxu0 %v150
    %v172 = vpop.f32.mrf.mxu0
    %v173 = vadd.f32 %v144, %v172
    %174 = vdwg.mxu0
    %v175 = vmax.f32 %v170, 0.0
    %v176 = vmax.f32 %v173, 0.0
    %179 = vrot.lane.b32.xlu0 %v175, 127
    %v180 = vpop.permute.xlu0 %179
    %181 = vrot.lane.b32.xlu0 %v176, 127
    %v182 = vpop.permute.xlu0 %181
    %v185 = vmax.f32 %v175, %v180
    %v186 = vmax.f32 %v176, %v182
    %v187 = vsub.f32 %v175, %v185
    %v188 = vsub.f32 %v176, %v186
    %v189 = vmul.f32 %v187, 1.442695
    %v190 = vpow.pop %v189
    %v191 = vmul.f32 %v188, 1.442695
    %v192 = vpow.pop %v191
    %195 = vrot.lane.b32.xlu0 %v185, 1
    %v196 = vpop.permute.xlu0 %195
    %197 = vrot.lane.b32.xlu0 %v186, 1
    %v198 = vpop.permute.xlu0 %197
    %v201 = vsub.f32 %v175, %v196
    %v202 = vsub.f32 %v176, %v198
    %v203 = vmul.f32 %v201, 1.442695
    %v204 = vpow.pop %v203
    %v205 = vmul.f32 %v202, 1.442695
    %v206 = vpow.pop %v205
    %209 = vrot.lane.b32.xlu0 %v204, 127
    %v210 = vpop.permute.xlu0 %209
    %211 = vrot.lane.b32.xlu0 %v206, 127
    %v212 = vpop.permute.xlu0 %211
    %v215 = vadd.f32 %v190, %v210
    %v216 = vadd.f32 %v192, %v212
    %v217 = vlog2.pop %v215
    %v218 = vmul.f32 %v217, 0.6931472
    %v219 = vlog2.pop %v216
    %v220 = vmul.f32 %v219, 0.6931472
    %v221 = vadd.f32 %v185, %v218
    %v222 = vadd.f32 %v186, %v220
    %224 = vset.pattern.permute.xlu0 0
    %225 = vperm.xlu0 %224, %v221
    %v226 = vpop.permute.xlu0 %225
    %229 = vset.pattern.permute.xlu0 0
    %230 = vperm.xlu0 %229, %v222
    %v231 = vpop.permute.xlu0 %230
    %v233 = vsub.f32 %v175, %v226
    %v234 = vsub.f32 %v176, %v231
    %vm235 = vcmask 15360
    %236 = vst.msk [vmem:[%s7] sm:$0xff] %vm235, %v233
    %237 = vst.msk [vmem:[%s7 + $0x8] sm:$0xff] %vm235, %v234
    // Predicated region
    $region38: #{tpu_custom_call.1} parent=1 // pred_check
      _
    $region39: #{tpu_custom_call.1} parent=1 // pred_check_branch
      %239 = sbr.rel (0) target = $region41
    $region40: #{tpu_custom_call.1} parent=1 // pred_region
      _
    $region41: #{tpu_custom_call.1} parent=1 // pred_fallthru
      _
    // Predicated region
    $region42: #{tpu_custom_call.1} parent=1 // pred_check
      _
    $region43: #{tpu_custom_call.1} parent=1 // pred_check_branch
      %241 = sbr.rel (0) target = $region45
    $region44: #{tpu_custom_call.1} parent=1 // pred_region
      _
    $region45: #{tpu_custom_call.1} parent=1 // pred_fallthru
      _
    %242 = vsyncpa [#allocation3], 1
    %243 = vsyncpa [#allocation5], 1

</llo_original>
